<compile_context>
chip_gen: v7x
topology: tpu7x:2x2x1
jax: 0.10.0
libtpu: 0.0.40
codegen_flags: <defaults>
</compile_context>

<pallas_src>
import functools

import jax
import jax.numpy as jnp
from jax.experimental import pallas as pl
from jax.experimental.pallas import tpu as pltpu

_LANE = 128
_MAX_TILE_ROWS = 2048          # 2048*128*4B = 1 MiB per f32 tile per input
_CHUNK_ROWS = 256              # unrolled sub-chunk inside a tile (bounds live vregs)
_VMEM_LIMIT = 32 * 1024 * 1024


def _round_up(n, m):
    return ((n + m - 1) // m) * m


def _loss_term(x_f32, mode, is_real):
    """Per-element loss term (before the 0.5/n weight)."""
    if mode == "lsgan":
        return (x_f32 - 1.0) * (x_f32 - 1.0) if is_real else x_f32 * x_f32
    # BCEWithLogits: target=1 -> softplus(-x); target=0 -> softplus(x)
    z = -x_f32 if is_real else x_f32
    return jnp.maximum(z, 0.0) + jnp.log1p(jnp.exp(-jnp.abs(x_f32)))


def _neutral(mode, is_real):
    """Pad value whose loss term is exactly 0 (so no in-kernel tail masking)."""
    if mode == "lsgan":
        return 1.0 if is_real else 0.0
    # softplus(-1e4) == 0.0 exactly in f32 (exp underflows); representable in bf16/f16.
    return 1e4 if is_real else -1e4


# ----------------------------------------------------------------------------
# Kernels
# ----------------------------------------------------------------------------
def _single_tile_kernel(real_ref, fake_ref, out_ref, *, w_real, w_fake, mode):
    """Whole-operand fast path: one grid step, no masking, no accumulator init."""
    r = real_ref[...].astype(jnp.float32)
    f = fake_ref[...].astype(jnp.float32)
    tr = _loss_term(r, mode, True) * w_real
    tf = _loss_term(f, mode, False) * w_fake
    # Fold into an (8,128) vreg slab with pure VPU adds (no XLU reduce in-kernel).
    out_ref[...] = (tr.reshape(-1, 8, _LANE).sum(axis=0)
                    + tf.reshape(-1, 8, _LANE).sum(axis=0))


def _multi_tile_kernel(real_ref, fake_ref, out_ref, *,
                       tile_rows, chunk_rows,
                       full_real, tail_real, full_fake, tail_fake,
                       n_tiles, w_real, w_fake, mode):
    """Streaming path: grid over tiles of (tile_rows, 128); out_ref is the accumulator."""
    t = pl.program_id(0)

    @pl.when(t == 0)
    def _():
        out_ref[...] = jnp.zeros_like(out_ref)

    def accum_full(ref, w, is_real):
        # Unrolled chunked accumulate: keeps only a few vregs live per step.
        n_chunks = tile_rows // chunk_rows

        def body(i, carry):
            start = pl.multiple_of(i * chunk_rows, chunk_rows)
            x = ref[pl.ds(start, chunk_rows), :].astype(jnp.float32)
            term = _loss_term(x, mode, is_real) * w
            out_ref[...] += term.reshape(chunk_rows // 8, 8, _LANE).sum(axis=0)
            return carry

        jax.lax.fori_loop(0, n_chunks, body, 0, unroll=True)

    def accum_tail(ref, w, is_real, tail_rows):
        # Boundary tile only: rows past the operand's extent are garbage (partial
        # block) -> cheap (rows,1) row-mask.  Lane-ragged tail is already neutral.
        x = ref[...].astype(jnp.float32)
        term = _loss_term(x, mode, is_real) * w
        row_ids = jax.lax.broadcasted_iota(jnp.int32, (tile_rows, 1), 0)
        term = jnp.where(row_ids < tail_rows, term, 0.0)
        out_ref[...] += term.reshape(tile_rows // 8, 8, _LANE).sum(axis=0)

    def handle(ref, w, is_real, n_full, tail_rows):
        if n_full == n_tiles:
            # Every grid step is a full interior tile for this operand: no guards.
            accum_full(ref, w, is_real)
            return
        if n_full > 0:
            @pl.when(t < n_full)
            def _():
                accum_full(ref, w, is_real)
        if tail_rows:
            @pl.when(t == n_full)
            def _():
                accum_tail(ref, w, is_real, tail_rows)
        # t past this operand's tiles: skip entirely (DMA elided by clamped index_map).

    handle(real_ref, w_real, True, full_real, tail_real)
    handle(fake_ref, w_fake, False, full_fake, tail_fake)


# ----------------------------------------------------------------------------
# Wrapper
# ----------------------------------------------------------------------------
def _to_slab(x, neutral, elem_multiple):
    """Flatten to (rows, 128) in the ORIGINAL dtype, padding with the neutral value
    only when the element count is not already a multiple of `elem_multiple`."""
    flat = x.reshape(-1)
    n = int(flat.shape[0])
    elems = max(_round_up(max(n, 1), elem_multiple), elem_multiple)
    if elems != n:
        # TODO(synk): for huge ragged inputs this is one full-array copy; a
        # 128-divisible-prefix + tiny-remainder split would avoid it.
        flat = jnp.pad(flat, (0, elems - n), constant_values=neutral)
    return flat.reshape(elems // _LANE, _LANE)


def discriminator_loss(pred_real, pred_fake, mode="lsgan"):
    """(loss(pred_real, 1) + loss(pred_fake, 0)) * 0.5  (mean reduction)."""
    n_real = int(pred_real.size)
    n_fake = int(pred_fake.size)
    # NOTE: empty inputs contribute 0 (PyTorch's mean of an empty tensor is NaN).
    w_real = 0.5 / float(max(n_real, 1))
    w_fake = 0.5 / float(max(n_fake, 1))

    rows_real = pl.cdiv(max(n_real, 1), _LANE)
    rows_fake = pl.cdiv(max(n_fake, 1), _LANE)

    cparams = pltpu.CompilerParams(dimension_semantics=("arbitrary",),
                                   vmem_limit_bytes=_VMEM_LIMIT)

    if max(rows_real, rows_fake) <= _MAX_TILE_ROWS:
        # ---------- single-tile fast path (typical patchGAN outputs) ----------
        real2d = _to_slab(pred_real, _neutral(mode, True), 8 * _LANE)
        fake2d = _to_slab(pred_fake, _neutral(mode, False), 8 * _LANE)
        rr, rf = real2d.shape[0], fake2d.shape[0]

        partials = pl.pallas_call(
            functools.partial(_single_tile_kernel,
                              w_real=w_real, w_fake=w_fake, mode=mode),
            out_shape=jax.ShapeDtypeStruct((8, _LANE), jnp.float32),
            grid_spec=pltpu.PrefetchScalarGridSpec(
                num_scalar_prefetch=0,
                grid=(1,),
                in_specs=[pl.BlockSpec((rr, _LANE), lambda i: (0, 0)),
                          pl.BlockSpec((rf, _LANE), lambda i: (0, 0))],
                out_specs=pl.BlockSpec((8, _LANE), lambda i: (0, 0))),
            compiler_params=cparams,
        )(real2d, fake2d)
        return jnp.sum(partials)

    # ---------------- multi-tile streaming path (large inputs) ----------------
    tile_rows = _MAX_TILE_ROWS
    real2d = _to_slab(pred_real, _neutral(mode, True), _LANE)   # lane-pad only
    fake2d = _to_slab(pred_fake, _neutral(mode, False), _LANE)
    rr, rf = real2d.shape[0], fake2d.shape[0]

    full_r, tail_r = rr // tile_rows, rr % tile_rows
    full_f, tail_f = rf // tile_rows, rf % tile_rows
    tiles_r = full_r + (1 if tail_r else 0)
    tiles_f = full_f + (1 if tail_f else 0)
    n_tiles = max(tiles_r, tiles_f)

    def _idx(tiles_op):
        if tiles_op == n_tiles:
            return lambda t: (t, 0)
        # Clamp past-extent steps (compute is skipped in-kernel; same block index
        # means the re-fetch DMA is elided).
        return lambda t: (jnp.minimum(t, tiles_op - 1), 0)

    kernel = functools.partial(
        _multi_tile_kernel,
        tile_rows=tile_rows, chunk_rows=_CHUNK_ROWS,
        full_real=full_r, tail_real=tail_r,
        full_fake=full_f, tail_fake=tail_f,
        n_tiles=n_tiles, w_real=w_real, w_fake=w_fake, mode=mode)

    partials = pl.pallas_call(
        kernel,
        out_shape=jax.ShapeDtypeStruct((8, _LANE), jnp.float32),
        grid_spec=pltpu.PrefetchScalarGridSpec(
            num_scalar_prefetch=0,
            grid=(n_tiles,),
            in_specs=[pl.BlockSpec((tile_rows, _LANE), _idx(tiles_r)),
                      pl.BlockSpec((tile_rows, _LANE), _idx(tiles_f))],
            out_specs=pl.BlockSpec((8, _LANE), lambda t: (0, 0))),
        compiler_params=cparams,
    )(real2d, fake2d)
    return jnp.sum(partials)


# ----------------------------------------------------------------------------
# Reference + self-test
# ----------------------------------------------------------------------------
def _reference(pred_real, pred_fake, mode="lsgan"):
    pr = pred_real.astype(jnp.float32)
    pf = pred_fake.astype(jnp.float32)
    if mode == "lsgan":
        l_r = jnp.mean((pr - 1.0) ** 2)
        l_f = jnp.mean(pf ** 2)
    else:
        l_r = jnp.mean(jnp.maximum(-pr, 0.0) + jnp.log1p(jnp.exp(-jnp.abs(pr))))
        l_f = jnp.mean(jnp.maximum(pf, 0.0) + jnp.log1p(jnp.exp(-jnp.abs(pf))))
    return (l_r + l_f) * 0.5


if __name__ == "__main__":
    key = jax.random.PRNGKey(0)
    k1, k2 = jax.random.split(key)

    # Typical patchGAN discriminator outputs, NCHW: [batch=2, channels=4, 16, 16]
    pred_real = jax.random.normal(k1, (2, 4, 16, 16), dtype=jnp.float32)
    pred_fake = jax.random.normal(k2, (2, 4, 16, 16), dtype=jnp.float32)
    loss = discriminator_loss(pred_real, pred_fake, mode="lsgan")
    jax.block_until_ready(loss)
    ref = _reference(pred_real, pred_fake, mode="lsgan")
    assert jnp.allclose(loss, ref, rtol=1e-5, atol=1e-6), (loss, ref)

    # BCE mode with ragged / mismatched sizes (exercises loss-neutral padding).
    pr2 = jax.random.normal(k1, (2, 1, 30, 30), dtype=jnp.float32)
    pf2 = jax.random.normal(k2, (3, 1, 30, 30), dtype=jnp.float32)
    loss2 = discriminator_loss(pr2, pf2, mode="vanilla")
    jax.block_until_ready(loss2)
    ref2 = _reference(pr2, pf2, mode="vanilla")
    assert jnp.allclose(loss2, ref2, rtol=1e-5, atol=1e-6), (loss2, ref2)

    # Larger mismatched inputs: exercises the multi-tile path (unguarded full
    # tiles, boundary-tile row mask, past-extent skip on the smaller operand).
    pr3 = jax.random.normal(k1, (4, 3, 160, 160), dtype=jnp.float32)   # 307200 elems
    pf3 = jax.random.normal(k2, (2, 3, 160, 160), dtype=jnp.float32)   # 153600 elems
    loss3 = discriminator_loss(pr3, pf3, mode="lsgan")
    jax.block_until_ready(loss3)
    ref3 = _reference(pr3, pf3, mode="lsgan")
    assert jnp.allclose(loss3, ref3, rtol=2e-4, atol=1e-5), (loss3, ref3)

    print("KERNEL_OK")
</pallas_src>

<mosaic_0001>
module attributes {stable_mosaic.version = 11 : i64} {
  func.func @_single_tile_kernel(%arg0: i32, %arg1: memref<16x128xf32, #tpu.memory_space<vmem>>, %arg2: memref<16x128xf32, #tpu.memory_space<vmem>>, %arg3: memref<8x128xf32, #tpu.memory_space<vmem>>) attributes {dimension_semantics = [#tpu.dimension_semantics<arbitrary>], iteration_bounds = array<i64: 1>, scalar_prefetch = 0 : i64, scratch_operands = 0 : i64, tpu.core_type = #tpu.core_type<tc>, window_params = [{pipeline_mode = #tpu.pipeline_mode<synchronous>, transform_indices = @transform_0, window_bounds = array<i64: 16, 128>}, {pipeline_mode = #tpu.pipeline_mode<synchronous>, transform_indices = @transform_1, window_bounds = array<i64: 16, 128>}, {pipeline_mode = #tpu.pipeline_mode<synchronous>, transform_indices = @transform_2, window_bounds = array<i64: 8, 128>}]} {
    %c0 = arith.constant 0 : index
    %c0_0 = arith.constant 0 : index
    %0 = vector.load %arg1[%c0, %c0_0] : memref<16x128xf32, #tpu.memory_space<vmem>>, vector<16x128xf32>
    %c0_1 = arith.constant 0 : index
    %c0_2 = arith.constant 0 : index
    %1 = vector.load %arg2[%c0_1, %c0_2] : memref<16x128xf32, #tpu.memory_space<vmem>>, vector<16x128xf32>
    %cst = arith.constant 1.000000e+00 : f32
    %2 = vector.broadcast %cst : f32 to vector<16x128xf32>
    %3 = arith.subf %0, %2 : vector<16x128xf32>
    %cst_3 = arith.constant 1.000000e+00 : f32
    %4 = vector.broadcast %cst_3 : f32 to vector<16x128xf32>
    %5 = arith.subf %0, %4 : vector<16x128xf32>
    %6 = arith.mulf %3, %5 : vector<16x128xf32>
    %cst_4 = arith.constant 2.44140625E-4 : f32
    %7 = vector.broadcast %cst_4 : f32 to vector<16x128xf32>
    %8 = arith.mulf %6, %7 : vector<16x128xf32>
    %9 = arith.mulf %1, %1 : vector<16x128xf32>
    %cst_5 = arith.constant 2.44140625E-4 : f32
    %10 = vector.broadcast %cst_5 : f32 to vector<16x128xf32>
    %11 = arith.mulf %9, %10 : vector<16x128xf32>
    %12 = vector.shape_cast %8 : vector<16x128xf32> to vector<2x8x128xf32>
    %cst_6 = arith.constant dense<0.000000e+00> : vector<8x128xf32>
    %13 = vector.multi_reduction <add>, %12, %cst_6 [0] : vector<2x8x128xf32> to vector<8x128xf32>
    %14 = vector.shape_cast %11 : vector<16x128xf32> to vector<2x8x128xf32>
    %cst_7 = arith.constant dense<0.000000e+00> : vector<8x128xf32>
    %15 = vector.multi_reduction <add>, %14, %cst_7 [0] : vector<2x8x128xf32> to vector<8x128xf32>
    %16 = arith.addf %13, %15 : vector<8x128xf32>
    %c0_8 = arith.constant 0 : index
    %c0_9 = arith.constant 0 : index
    %17 = vector.load %arg3[%c0_8, %c0_9] : memref<8x128xf32, #tpu.memory_space<vmem>>, vector<8x128xf32>
    tpu.vector_store %arg3[%c0_8, %c0_9], %16 {strides = array<i32>} : memref<8x128xf32, #tpu.memory_space<vmem>>, vector<8x128xf32>,
    return
  }
  func.func @transform_0(%arg0: i32) -> (i32, i32) {
    %c0_i32 = arith.constant 0 : i32
    %c0_i32_0 = arith.constant 0 : i32
    %c0_i32_1 = arith.constant 0 : i32
    return %c0_i32, %c0_i32_0 : i32, i32
  }
  func.func @transform_1(%arg0: i32) -> (i32, i32) {
    %c0_i32 = arith.constant 0 : i32
    %c0_i32_0 = arith.constant 0 : i32
    %c0_i32_1 = arith.constant 0 : i32
    return %c0_i32, %c0_i32_0 : i32, i32
  }
  func.func @transform_2(%arg0: i32) -> (i32, i32) {
    %c0_i32 = arith.constant 0 : i32
    %c0_i32_0 = arith.constant 0 : i32
    %c0_i32_1 = arith.constant 0 : i32
    return %c0_i32, %c0_i32_0 : i32, i32
  }
}

</mosaic_0001>

<llo_original>
// kernel: tpu_custom_call.1
$region0: #{tpu_custom_call.1}
  #allocation0 [shape = 'u32[]', space=smem, size = 0x4, offset = 0x4, fixed_abs, tag = 'smem constant byte address 0x4 - core index']
  #allocation1 [shape = 'u32[144,128]{1,0:T(1,128)}', space=vmem, size = 0x12000, scoped, tag = 'internal scratch']
  %s0 = inlined_call_operand.hbm [shape: f32[16,128], index: 0, kind: input, shape index: {}]
  %s1 = inlined_call_operand.hbm [shape: f32[16,128], index: 1, kind: input, shape index: {}]
  %s2 = inlined_call_operand.hbm [shape: f32[8,128], index: 2, kind: output, shape index: {}]
  %s3 = sld [smem:[#allocation0]]
  $region26: #{tpu_custom_call.1} parent=0
    _
  %s5 = ssub.s32 1, %s3
  %s6 = scalar_select 0, %s5, %s3
  $region1: #{tpu_custom_call.1} parent=0
    #allocation2 [shape = 'u8[8192]{0}', space=vmem, size = 0x2000, scoped, tag = 'input window, operand 0, single buffered']
    #allocation3 [shape = 's32[1]{0}', space=sflag, size = 0x4, scoped, tag = 'scoped memory for tpu_custom_call.1']
    #allocation4 [shape = 's32[1]{0}', space=sflag, size = 0x4, scoped, tag = 'scoped memory for tpu_custom_call.1']
    #allocation5 [shape = 'u8[8192]{0}', space=vmem, size = 0x2000, scoped, tag = 'input window, operand 1, single buffered']
    #allocation6 [shape = 's32[1]{0}', space=sflag, size = 0x4, scoped, tag = 'scoped memory for tpu_custom_call.1']
    #allocation7 [shape = 'u8[4096]{0}', space=vmem, size = 0x1000, scoped, tag = 'output window, operand 0, single buffered']
    %7 = vsyncpa [#allocation3], 0
    %8 = vsyncpa [#allocation6], 0
    %9 = vsyncpa [#allocation4], 0
    // Predicated region
    $region2: #{tpu_custom_call.1} parent=1 // pred_check
      _
    $region3: #{tpu_custom_call.1} parent=1 // pred_check_branch
      %11 = sbr.rel (0) target = $region5
    $region4: #{tpu_custom_call.1} parent=1 // pred_region
      %s13 = ssub.s32 256, 256
      %14 = vsyncadd [#allocation3], %s13
      %s15 = sshll.u32 [#allocation2], 4
      %s16 = int_to_ptr.vmem [resolvable:$true] %s15
      %21 = dma.hbm_to_vmem [thread:$0]  %s0, 256, %s16, [#allocation3], 128, 128, 8
    $region5: #{tpu_custom_call.1} parent=1 // pred_fallthru
      _
    // Predicated region
    $region6: #{tpu_custom_call.1} parent=1 // pred_check
      _
    $region7: #{tpu_custom_call.1} parent=1 // pred_check_branch
      %23 = sbr.rel (0) target = $region9
    $region8: #{tpu_custom_call.1} parent=1 // pred_region
      %s25 = ssub.s32 256, 256
      %26 = vsyncadd [#allocation6], %s25
      %s27 = sshll.u32 [#allocation5], 4
      %s28 = int_to_ptr.vmem [resolvable:$true] %s27
      %33 = dma.hbm_to_vmem [thread:$0]  %s1, 256, %s28, [#allocation6], 128, 128, 8
    $region9: #{tpu_custom_call.1} parent=1 // pred_fallthru
      _
    // Predicated region
    $region10: #{tpu_custom_call.1} parent=1 // pred_check
      _
    $region11: #{tpu_custom_call.1} parent=1 // pred_check_branch
      %35 = sbr.rel (0) target = $region13
    $region12: #{tpu_custom_call.1} parent=1 // pred_region
      %36 = dma.done [#allocation3], 256
    $region13: #{tpu_custom_call.1} parent=1 // pred_fallthru
      _
    // Predicated region
    $region14: #{tpu_custom_call.1} parent=1 // pred_check
      _
    $region15: #{tpu_custom_call.1} parent=1 // pred_check_branch
      %38 = sbr.rel (0) target = $region17
    $region16: #{tpu_custom_call.1} parent=1 // pred_region
      %39 = dma.done [#allocation6], 256
    $region17: #{tpu_custom_call.1} parent=1 // pred_fallthru
      _
    %v40 = vld [vmem:[#allocation2] sm:$0xff]
    %v41 = vld [vmem:[#allocation2 + $0x8] sm:$0xff]
    %v42 = vld [vmem:[#allocation5] sm:$0xff]
    %v43 = vld [vmem:[#allocation5 + $0x8] sm:$0xff]
    %v44 = vsub.f32 %v40, 1.0
    %v45 = vsub.f32 %v41, 1.0
    %v46 = vmul.f32 %v44, %v44
    %v47 = vmul.f32 %v45, %v45
    %v48 = vmul.f32 %v46, 0.00024414063
    %v49 = vmul.f32 %v47, 0.00024414063
    %v50 = vmul.f32 %v42, %v42
    %v51 = vmul.f32 %v43, %v43
    %v52 = vmul.f32 %v50, 0.00024414063
    %v53 = vmul.f32 %v51, 0.00024414063
    %v54 = vadd.f32 %v48, %v49
    %v55 = vadd.f32 %v52, %v53
    %v56 = vadd.f32 %v54, %v55
    %57 = vst [vmem:[#allocation7] sm:$0xff] %v56
    // Predicated region
    $region18: #{tpu_custom_call.1} parent=1 // pred_check
      _
    $region19: #{tpu_custom_call.1} parent=1 // pred_check_branch
      %59 = sbr.rel (0) target = $region21
    $region20: #{tpu_custom_call.1} parent=1 // pred_region
      %s61 = ssub.s32 128, 128
      %62 = vsyncadd [#allocation4], %s61
      %s64 = sshll.u32 [#allocation7], 4
      %s65 = int_to_ptr.vmem [resolvable:$true] %s64
      %67 = dma.vmem_to_hbm [thread:$0]  %s65, 128, %s2, [#allocation4]
    $region21: #{tpu_custom_call.1} parent=1 // pred_fallthru
      _
    // Predicated region
    $region22: #{tpu_custom_call.1} parent=1 // pred_check
      _
    $region23: #{tpu_custom_call.1} parent=1 // pred_check_branch
      %69 = sbr.rel (0) target = $region25
    $region24: #{tpu_custom_call.1} parent=1 // pred_region
      %70 = dma.done [#allocation4], 128
    $region25: #{tpu_custom_call.1} parent=1 // pred_fallthru
      _
    %71 = vsyncpa [#allocation3], 1
    %72 = vsyncpa [#allocation6], 1
    %73 = vsyncpa [#allocation4], 1

</llo_original>
